<compile_context>
chip_gen: v7x
topology: tpu7x:2x2x1
jax: 0.10.0
libtpu: 0.0.40
codegen_flags: <defaults>
</compile_context>

<pallas_src>
import math

import jax
import jax.numpy as jnp
from jax.experimental import pallas as pl
from jax.experimental.pallas import tpu as pltpu

_LANE = 128


def _logreg_kernel(theta_ref, x_ref, bias_ref, o_ref, acc_ref):
    # theta_ref: (1, TK) VMEM, x_ref: (TB, TK) VMEM, bias_ref: (1, 1) SMEM,
    # o_ref: (1, TB) VMEM, acc_ref: (1, TB) f32 VMEM scratch.
    k = pl.program_id(1)

    @pl.when(k == 0)
    def _init():
        acc_ref[...] = jnp.zeros_like(acc_ref)

    t = theta_ref[...]
    xb = x_ref[...]
    ct = jnp.promote_types(t.dtype, xb.dtype)
    # NT orientation: contract F (last axis of both operands) on the MXU.
    # The (TB, TK) x tile is never transposed/relaid-out; the tiny theta tile
    # is the only operand that could need re-latching. Result is lane-dense.
    acc_ref[...] += jax.lax.dot_general(
        t.astype(ct),
        xb.astype(ct),
        dimension_numbers=(((1,), (1,)), ((), ())),
        preferred_element_type=jnp.float32,
    )

    @pl.when(k == pl.num_programs(1) - 1)
    def _epilogue():
        s = acc_ref[...] + bias_ref[0, 0]
        # Exact sigmoid; runs once per batch tile, hidden under the next DMA.
        o_ref[...] = (1.0 / (1.0 + jnp.exp(-s))).astype(o_ref.dtype)


def _round_down(v, m):
    return (v // m) * m


def _vmem_capacity_bytes():
    try:
        return int(pltpu.get_tpu_info().vmem_capacity_bytes)
    except Exception:
        return 64 * 1024 * 1024  # conservative fallback = v7x per-TC VMEM


def _auto_tiles(B, F, itemsize, per_buf_budget):
    """Pick (block_b, block_k) for the streamed x tiles."""
    # ---- batch tile ----
    if B < _LANE:
        block_b = B  # full-extent block (satisfies the (8,128) rule exactly)
    else:
        cap_by_b = _round_down(B, _LANE)                       # never exceed B
        # >=512-row floor; aim for >=4 batch tiles when B is large enough
        # (2 grid steps per TensorCore on v7x).
        tgt_rows = max(512, _round_down(pl.cdiv(B, 4), _LANE))
        fit_rows = max(_LANE,
                       _round_down(per_buf_budget // max(F * itemsize, 1),
                                   _LANE))
        block_b = max(_LANE, min(tgt_rows, fit_rows, cap_by_b))

    # ---- feature (reduction) tile ----
    if block_b * F * itemsize <= per_buf_budget or F <= _LANE:
        block_k = F
    elif F % _LANE == 0:
        max_k = max(_LANE,
                    _round_down(per_buf_budget // (block_b * itemsize), _LANE))
        block_k = _LANE
        k = max_k
        while k >= _LANE:
            if F % k == 0:
                block_k = k
                break
            k -= _LANE
    else:
        # A ragged K tile would mix garbage into the contraction, so keep the
        # full feature dim and shrink the batch tile instead.
        # TODO(synk): zero-pad F in the wrapper if huge non-128-multiple F
        # ever needs true K-tiling.
        block_k = F
        if B >= _LANE:
            fit_rows = max(_LANE,
                           _round_down(per_buf_budget // max(F * itemsize, 1),
                                       _LANE))
            block_b = max(_LANE, min(block_b, fit_rows))
    return block_b, block_k


def logistic_regression_forward(x, theta, bias, *, block_b=None, block_k=None):
    """x: (B, F), theta: (1, F), bias: (1,) -> (B,) f32 (sigmoid(theta @ x.T + bias))."""
    B, F = x.shape
    theta = jnp.asarray(theta).reshape(1, F)          # keep native (f32) dtype
    bias2d = jnp.asarray(bias, dtype=jnp.float32).reshape(1, 1)

    x_item = jnp.dtype(x.dtype).itemsize
    t_item = jnp.dtype(theta.dtype).itemsize

    vmem_cap = _vmem_capacity_bytes()
    # Per-buffer budget for the double-buffered x stream (generation-aware).
    per_buf = max(1 << 20, min(8 << 20, vmem_cap // 8))

    auto_b, auto_k = _auto_tiles(B, F, x_item, per_buf)
    block_b = auto_b if block_b is None else int(block_b)
    block_k = auto_k if block_k is None else int(block_k)

    grid = (pl.cdiv(B, block_b), pl.cdiv(F, block_k))

    # Explicit scoped-VMEM limit: 2 x buffers + 2 theta buffers + output +
    # accumulator + headroom.  Clamped below physical VMEM on every chip.
    resident = (2 * block_b * block_k * x_item
                + 2 * block_k * t_item
                + 3 * block_b * 4
                + (1 << 20))
    vmem_limit = int(min(max(resident + (4 << 20), 32 << 20),
                         max(vmem_cap - (8 << 20), 16 << 20)))

    cost = pl.CostEstimate(
        flops=2 * B * F,
        transcendentals=B,
        bytes_accessed=B * F * x_item + F * t_item + 4 * B + 4,
    )

    out = pl.pallas_call(
        _logreg_kernel,
        out_shape=jax.ShapeDtypeStruct((1, B), jnp.float32),
        grid=grid,
        in_specs=[
            # theta: tiny, tiled only along F.
            pl.BlockSpec((1, block_k), lambda i, k: (0, k)),
            # x: streamed over (batch, feature) — auto double-buffered.
            pl.BlockSpec((block_b, block_k), lambda i, k: (i, k)),
            # bias: (1, 1) scalar in SMEM.
            pl.BlockSpec(memory_space=pltpu.MemorySpace.SMEM),
        ],
        # Lane-dense output tile, resident across the reduction axis.
        out_specs=pl.BlockSpec((1, block_b), lambda i, k: (0, i)),
        scratch_shapes=[pltpu.VMEM((1, block_b), jnp.float32)],
        compiler_params=pltpu.CompilerParams(
            dimension_semantics=("parallel", "arbitrary"),
            vmem_limit_bytes=vmem_limit,
        ),
        cost_estimate=cost,
    )(theta, x, bias2d)

    # NOTE: torch .squeeze() would return a 0-d scalar for B == 1; here we
    # always return shape (B,). Identical for B > 1.
    return out.reshape(B)


def init_params(key, num_input_features):
    """theta: (1, F) kaiming_uniform_ (fan_in=F -> bound=sqrt(6/F)); bias: zeros."""
    fan_in = num_input_features
    bound = math.sqrt(6.0 / fan_in)
    theta = jax.random.uniform(
        key, (1, num_input_features), dtype=jnp.float32,
        minval=-bound, maxval=bound,
    )
    bias = jnp.zeros((1,), dtype=jnp.float32)
    return theta, bias


if __name__ == "__main__":
    key = jax.random.PRNGKey(0)
    k_theta, k_x1, k_x2, k_x3 = jax.random.split(key, 4)

    def ref_fwd(x, theta, bias):
        return jax.nn.sigmoid((theta @ x.T).reshape(-1) + bias[0])

    bias = jnp.array([0.25], dtype=jnp.float32)

    # 1) Auto-tiled path: B=1024, F=256 -> block_b=512, grid=(2, 1).
    B, F = 1024, 256
    theta1, _ = init_params(k_theta, F)
    x1 = jax.random.normal(k_x1, (B, F), dtype=jnp.float32)
    y1 = logistic_regression_forward(x1, theta1, bias)
    jax.block_until_ready(y1)
    assert y1.shape == (B,)
    assert jnp.allclose(y1, ref_fwd(x1, theta1, bias), atol=1e-5, rtol=1e-5), \
        float(jnp.max(jnp.abs(y1 - ref_fwd(x1, theta1, bias))))

    # 2) Explicit K-tiling (accumulator + pl.when epilogue): grid=(2, 4).
    B, F = 256, 512
    theta2, _ = init_params(k_theta, F)
    x2 = jax.random.normal(k_x2, (B, F), dtype=jnp.float32)
    y2 = logistic_regression_forward(x2, theta2, bias, block_b=128, block_k=128)
    jax.block_until_ready(y2)
    assert jnp.allclose(y2, ref_fwd(x2, theta2, bias), atol=1e-5, rtol=1e-5)

    # 3) Ragged batch (B not a multiple of 128): grid=(3, 1), masked last tile.
    B, F = 300, 64
    theta3, _ = init_params(k_theta, F)
    x3 = jax.random.normal(k_x3, (B, F), dtype=jnp.float32)
    y3 = logistic_regression_forward(x3, theta3, bias, block_b=128)
    jax.block_until_ready(y3)
    assert y3.shape == (B,)
    assert jnp.allclose(y3, ref_fwd(x3, theta3, bias), atol=1e-5, rtol=1e-5)

    print("KERNEL_OK")
</pallas_src>

<mosaic_0001>
module attributes {stable_mosaic.version = 11 : i64} {
  func.func @_logreg_kernel(%arg0: i32, %arg1: i32, %arg2: memref<1x256xf32, #tpu.memory_space<vmem>>, %arg3: memref<512x256xf32, #tpu.memory_space<vmem>>, %arg4: memref<1x1xf32, #tpu.memory_space<smem>>, %arg5: memref<1x512xf32, #tpu.memory_space<vmem>>, %arg6: memref<1x512xf32, #tpu.memory_space<vmem>>) attributes {dimension_semantics = [#tpu.dimension_semantics<parallel>, #tpu.dimension_semantics<arbitrary>], iteration_bounds = array<i64: 2, 1>, scalar_prefetch = 0 : i64, scratch_operands = 1 : i64, tpu.core_type = #tpu.core_type<tc>, window_params = [{transform_indices = @transform_0, window_bounds = array<i64: 1, 256>}, {transform_indices = @transform_1, window_bounds = array<i64: 512, 256>}, {transform_indices = @transform_2, window_bounds = array<i64: 1, 1>}, {transform_indices = @transform_3, window_bounds = array<i64: 1, 512>}]} {
    %c0_i32 = arith.constant 0 : i32
    %0 = arith.cmpi eq, %arg1, %c0_i32 : i32
    %1 = arith.extui %0 : i1 to i32
    %c0_i32_0 = arith.constant 0 : i32
    %2 = arith.cmpi ne, %1, %c0_i32_0 : i32
    scf.if %2 {
      %cst_10 = arith.constant 0.000000e+00 : f32
      %12 = vector.broadcast %cst_10 : f32 to vector<1x512xf32>
      %c0_11 = arith.constant 0 : index
      %c0_12 = arith.constant 0 : index
      %13 = vector.load %arg6[%c0_11, %c0_12] : memref<1x512xf32, #tpu.memory_space<vmem>>, vector<1x512xf32>
      tpu.vector_store %arg6[%c0_11, %c0_12], %12 {strides = array<i32>} : memref<1x512xf32, #tpu.memory_space<vmem>>, vector<1x512xf32>,
    } else {
    }
    %c0 = arith.constant 0 : index
    %c0_1 = arith.constant 0 : index
    %3 = vector.load %arg2[%c0, %c0_1] : memref<1x256xf32, #tpu.memory_space<vmem>>, vector<1x256xf32>
    %c0_2 = arith.constant 0 : index
    %c0_3 = arith.constant 0 : index
    %4 = vector.load %arg3[%c0_2, %c0_3] : memref<512x256xf32, #tpu.memory_space<vmem>>, vector<512x256xf32>
    %c0_4 = arith.constant 0 : index
    %c0_5 = arith.constant 0 : index
    %5 = vector.load %arg6[%c0_4, %c0_5] : memref<1x512xf32, #tpu.memory_space<vmem>>, vector<1x512xf32>
    %cst = arith.constant dense<0.000000e+00> : vector<1x512xf32>
    %6 = tpu.matmul %3, %4, %cst {dimension_numbers = #tpu.dot_dimension_numbers<[1], [1], [0], [0], [0, 0, 1, 0], [], []>} : vector<1x256xf32>, vector<512x256xf32>, vector<1x512xf32> -> vector<1x512xf32>
    %7 = arith.addf %5, %6 : vector<1x512xf32>
    %c0_6 = arith.constant 0 : index
    %c0_7 = arith.constant 0 : index
    %8 = vector.load %arg6[%c0_6, %c0_7] : memref<1x512xf32, #tpu.memory_space<vmem>>, vector<1x512xf32>
    tpu.vector_store %arg6[%c0_6, %c0_7], %7 {strides = array<i32>} : memref<1x512xf32, #tpu.memory_space<vmem>>, vector<1x512xf32>,
    %c0_i32_8 = arith.constant 0 : i32
    %9 = arith.cmpi eq, %arg1, %c0_i32_8 : i32
    %10 = arith.extui %9 : i1 to i32
    %c0_i32_9 = arith.constant 0 : i32
    %11 = arith.cmpi ne, %10, %c0_i32_9 : i32
    scf.if %11 {
      %c0_10 = arith.constant 0 : index
      %c0_11 = arith.constant 0 : index
      %12 = vector.load %arg6[%c0_10, %c0_11] : memref<1x512xf32, #tpu.memory_space<vmem>>, vector<1x512xf32>
      %c0_12 = arith.constant 0 : index
      %c0_13 = arith.constant 0 : index
      %13 = memref.load %arg4[%c0_12, %c0_13] : memref<1x1xf32, #tpu.memory_space<smem>>
      %14 = vector.broadcast %13 : f32 to vector<1x512xf32>
      %15 = arith.addf %12, %14 : vector<1x512xf32>
      %cst_14 = arith.constant 0.000000e+00 : f32
      %16 = vector.broadcast %cst_14 : f32 to vector<1x512xf32>
      %17 = arith.subf %16, %15 : vector<1x512xf32>
      %18 = math.exp %17 : vector<1x512xf32>
      %cst_15 = arith.constant 1.000000e+00 : f32
      %19 = vector.broadcast %cst_15 : f32 to vector<1x512xf32>
      %20 = arith.addf %19, %18 : vector<1x512xf32>
      %cst_16 = arith.constant 1.000000e+00 : f32
      %21 = vector.broadcast %cst_16 : f32 to vector<1x512xf32>
      %22 = arith.divf %21, %20 : vector<1x512xf32>
      %c0_17 = arith.constant 0 : index
      %c0_18 = arith.constant 0 : index
      %23 = vector.load %arg5[%c0_17, %c0_18] : memref<1x512xf32, #tpu.memory_space<vmem>>, vector<1x512xf32>
      tpu.vector_store %arg5[%c0_17, %c0_18], %22 {strides = array<i32>} : memref<1x512xf32, #tpu.memory_space<vmem>>, vector<1x512xf32>,
    } else {
    }
    return
  }
  func.func @transform_0(%arg0: i32, %arg1: i32) -> (i32, i32) {
    %c0_i32 = arith.constant 0 : i32
    %c0_i32_0 = arith.constant 0 : i32
    return %c0_i32, %arg1 : i32, i32
  }
  func.func @transform_1(%arg0: i32, %arg1: i32) -> (i32, i32) {
    %c0_i32 = arith.constant 0 : i32
    return %arg0, %arg1 : i32, i32
  }
  func.func @transform_2(%arg0: i32, %arg1: i32) -> (i32, i32) {
    %c0_i32 = arith.constant 0 : i32
    %c0_i32_0 = arith.constant 0 : i32
    %c0_i32_1 = arith.constant 0 : i32
    return %c0_i32, %c0_i32_0 : i32, i32
  }
  func.func @transform_3(%arg0: i32, %arg1: i32) -> (i32, i32) {
    %c0_i32 = arith.constant 0 : i32
    %c0_i32_0 = arith.constant 0 : i32
    return %c0_i32, %arg0 : i32, i32
  }
}

</mosaic_0001>

<llo_original>
// kernel: tpu_custom_call.1
$region0: #{tpu_custom_call.1}
  #allocation0 [shape = 'u32[]', space=smem, size = 0x4, offset = 0x4, fixed_abs, tag = 'smem constant byte address 0x4 - core index']
  #allocation1 [shape = 'u32[144,128]{1,0:T(1,128)}', space=vmem, size = 0x12000, scoped, tag = 'internal scratch']
  #allocation2 [shape = 'f32[1,512]{1,0:T(1,128)}', space=vmem, size = 0x800, scoped, tag = 'scratch operand']
  #allocation3 [shape = 'f32[1,1]{1,0:T(1,128)S(6)}', space=smem, size = 0x200, scoped, tag = 'scoped memory for tpu_custom_call.1']
  %s0 = inlined_call_operand.vmem [shape: f32[1,256], index: 0, kind: input, shape index: {}]
  %s1 = inlined_call_operand.hbm [shape: f32[1024,256], index: 1, kind: input, shape index: {}]
  %s2 = inlined_call_operand.<no memory space> [shape: f32[1,1], index: 2, kind: input, shape index: {}]
  %s3 = inlined_call_operand.hbm [shape: f32[1,1024], index: 3, kind: output, shape index: {}]
  %s4 = sld [smem:[#allocation0]]
  $region57: #{tpu_custom_call.1} parent=0
    _
  %s6 = ssub.s32 1, %s4
  %s7 = scalar_select 0, %s6, %s4
  %8 = sst [smem:[#allocation3]] %s2
  $region1: #{tpu_custom_call.1} parent=0
    #allocation4 [shape = 'u8[1048576]{0}', space=vmem, size = 0x100000, scoped, tag = 'input window, operand 1']
    #allocation5 [shape = 's32[2]{0}', space=sflag, size = 0x8, scoped, tag = 'scoped memory for tpu_custom_call.1']
    #allocation6 [shape = 's32[2]{0}', space=sflag, size = 0x8, scoped, tag = 'scoped memory for tpu_custom_call.1']
    #allocation7 [shape = 'u8[4096]{0}', space=vmem, size = 0x1000, scoped, tag = 'output window, operand 0']
    %9 = vsyncpa [#allocation5], 0
    %s10 = scalar_lea.sflag [#allocation5], 1
    %11 = vsyncpa %s10, 0
    %12 = vsyncpa [#allocation6], 0
    %s13 = scalar_lea.sflag [#allocation6], 1
    %14 = vsyncpa %s13, 0
    loop: start=0, step=1, limit=4
    $region2: #{tpu_custom_call.1} parent=1 // loop_pre_header
      _
    $region3: #{tpu_custom_call.1} parent=1 // loop_header
      %s16 = sphi 0, %s20
      %p17 = scmp.ge.s32.totalorder %s16, 4
      %s23 = sphi 0, %s35
      %s24 = sphi 0, %s31
      %s25 = sphi 0, %s23
      %s26 = sphi 0, %s24
      %s27 = sphi 0, %s25
      %s28 = sphi 0, %s26
      %s38 = sphi 0, %s40
      %s41 = sphi 0, %s38
      %s42 = sphi 0, %s41
      %s58 = sphi 0, %s42
      %s66 = sphi 0, %s68
      %s69 = sphi 0, %s66
      %s70 = sphi 0, %s69
      %s86 = sphi 0, %s70
      %s90 = sphi 0, %s90
      %s92 = sphi 0, %s90
      %s93 = sphi 0, %s92
      %s107 = sphi 0, %s93
      %s113 = sphi 0, %s115
      %s116 = sphi 0, %s113
      %s117 = sphi 0, %s116
      %s133 = sphi 0, %s117
    $region4: #{tpu_custom_call.1} parent=1 // loop_header_branch
      %19 = sbr.rel (%p17) target = $region8
    $region5: #{tpu_custom_call.1} parent=1 // loop_body
      %s21 = ssub.s32 %s16, 1
      %s22 = ssub.s32 %s16, 2
      %s29 = sadd.s32 1, %s24
      %p30 = scmp.ge.s32.totalorder %s29, 1
      %s31 = scalar_select %p30, 0, %s29
      %s32 = sadd.s32 1, %s23
      %s33 = scalar_select %p30, %s32, %s23
      %p34 = scmp.ge.s32.totalorder %s33, 2
      %s35 = scalar_select %p34, 0, %s33
      %s36 = ssub.s32 %s24, %s31
      %p37 = scmp.eq.s32.totalorder %s36, 0
      %s39 = sadd.s32 %s38, 1
      %s40 = scalar_select %p37, %s38, %s39
      %p43 = pneg %p37
      %p44 = scmp.eq.s32.totalorder %s16, 1
      %p45 = por %p43, %p44
      %p46 = scmp.ne.s32.totalorder %s38, %s41
      %p47 = scmp.eq.s32.totalorder %s16, 0
      %p48 = por %p46, %p47
      %p49 = scmp.ne.s32.totalorder %s38, %s41
      %p50 = scmp.eq.s32.totalorder %s21, 1
      %p51 = por %p49, %p50
      %p52 = scmp.ne.s32.totalorder %s41, %s42
      %p53 = scmp.eq.s32.totalorder %s21, 0
      %p54 = por %p52, %p53
      %p55 = scmp.ne.s32.totalorder %s41, %s42
      %p56 = scmp.eq.s32.totalorder %s22, 1
      %p57 = por %p55, %p56
      %p59 = scmp.ne.s32.totalorder %s42, %s58
      %p60 = scmp.eq.s32.totalorder %s22, 0
      %p61 = por %p59, %p60
      %s62 = ssub.s32 %s23, %s35
      %s63 = ssub.s32 %s24, %s31
      %s64 = sor.u32 %s62, %s63
      %p65 = scmp.eq.s32.totalorder %s64, 0
      %s67 = sadd.s32 %s66, 1
      %s68 = scalar_select %p65, %s66, %s67
      %p71 = pneg %p65
      %p72 = scmp.eq.s32.totalorder %s16, 1
      %p73 = por %p71, %p72
      %p74 = scmp.ne.s32.totalorder %s66, %s69
      %p75 = scmp.eq.s32.totalorder %s16, 0
      %p76 = por %p74, %p75
      %p77 = scmp.ne.s32.totalorder %s66, %s69
      %p78 = scmp.eq.s32.totalorder %s21, 1
      %p79 = por %p77, %p78
      %p80 = scmp.ne.s32.totalorder %s69, %s70
      %p81 = scmp.eq.s32.totalorder %s21, 0
      %p82 = por %p80, %p81
      %p83 = scmp.ne.s32.totalorder %s69, %s70
      %p84 = scmp.eq.s32.totalorder %s22, 1
      %p85 = por %p83, %p84
      %p87 = scmp.ne.s32.totalorder %s70, %s86
      %p88 = scmp.eq.s32.totalorder %s22, 0
      %p89 = por %p87, %p88
      %s91 = sadd.s32 %s90, 1
      %p94 = scmp.eq.s32.totalorder %s16, 1
      %p95 = scmp.ne.s32.totalorder %s90, %s92
      %p96 = scmp.eq.s32.totalorder %s16, 0
      %p97 = por %p95, %p96
      %p98 = scmp.ne.s32.totalorder %s90, %s92
      %p99 = scmp.eq.s32.totalorder %s21, 1
      %p100 = por %p98, %p99
      %p101 = scmp.ne.s32.totalorder %s92, %s93
      %p102 = scmp.eq.s32.totalorder %s21, 0
      %p103 = por %p101, %p102
      %p104 = scmp.ne.s32.totalorder %s92, %s93
      %p105 = scmp.eq.s32.totalorder %s22, 1
      %p106 = por %p104, %p105
      %p108 = scmp.ne.s32.totalorder %s93, %s107
      %p109 = scmp.eq.s32.totalorder %s22, 0
      %p110 = por %p108, %p109
      %s111 = ssub.s32 %s23, %s35
      %p112 = scmp.eq.s32.totalorder %s111, 0
      %s114 = sadd.s32 %s113, 1
      %s115 = scalar_select %p112, %s113, %s114
      %p118 = pneg %p112
      %p119 = scmp.eq.s32.totalorder %s16, 1
      %p120 = por %p118, %p119
      %p121 = scmp.ne.s32.totalorder %s113, %s116
      %p122 = scmp.eq.s32.totalorder %s16, 0
      %p123 = por %p121, %p122
      %p124 = scmp.ne.s32.totalorder %s113, %s116
      %p125 = scmp.eq.s32.totalorder %s21, 1
      %p126 = por %p124, %p125
      %p127 = scmp.ne.s32.totalorder %s116, %s117
      %p128 = scmp.eq.s32.totalorder %s21, 0
      %p129 = por %p127, %p128
      %p130 = scmp.ne.s32.totalorder %s116, %s117
      %p131 = scmp.eq.s32.totalorder %s22, 1
      %p132 = por %p130, %p131
      %p134 = scmp.ne.s32.totalorder %s117, %s133
      %p135 = scmp.eq.s32.totalorder %s22, 0
      %p136 = por %p134, %p135
      %p137 = scmp.le.s32.totalorder 1, %s16
      %p138 = scmp.lt.s32.totalorder %s16, 3
      %p139 = pnand %p137, %p138
      %p140 = pneg %p139
      // Predicated region
      $region9: #{tpu_custom_call.1} parent=5 // pred_check
        _
      $region10: #{tpu_custom_call.1} parent=5 // pred_check_branch
        %142 = sbr.rel (%p139) target = $region12
      $region11: #{tpu_custom_call.1} parent=5 // pred_region
        %s143 = ssub.s32 %s16, 1
        // Predicated region
        $region13: #{tpu_custom_call.1} parent=11 // pred_check
          %p144 = pneg %p54
        $region14: #{tpu_custom_call.1} parent=11 // pred_check_branch
          %146 = sbr.rel (%p144) target = $region16
        $region15: #{tpu_custom_call.1} parent=11 // pred_region
          %s147 = smul.u32 2, %s26
          %p148 = scmp.lt.s32.totalorder %s147, 1
          %s149 = scalar_select %p148, %s147, 1
          %s150 = scalar_lea.vmem %s0, %s149
          %s151 = smul.u32 2, %s26
        $region16: #{tpu_custom_call.1} parent=11 // pred_fallthru
          _
        // Predicated region
        $region17: #{tpu_custom_call.1} parent=11 // pred_check
          %p152 = pneg %p103
        $region18: #{tpu_custom_call.1} parent=11 // pred_check_branch
          %154 = sbr.rel (%p152) target = $region20
        $region19: #{tpu_custom_call.1} parent=11 // pred_region
          _
        $region20: #{tpu_custom_call.1} parent=11 // pred_fallthru
          _
      $region12: #{tpu_custom_call.1} parent=5 // pred_fallthru
        _
      %p155 = scmp.lt.s32.totalorder %s16, 2
      // Predicated region
      $region21: #{tpu_custom_call.1} parent=5 // pred_check
        %p156 = pneg %p155
      $region22: #{tpu_custom_call.1} parent=5 // pred_check_branch
        %158 = sbr.rel (%p156) target = $region24
      $region23: #{tpu_custom_call.1} parent=5 // pred_region
        // Predicated region
        $region25: #{tpu_custom_call.1} parent=23 // pred_check
          %p159 = pneg %p76
        $region26: #{tpu_custom_call.1} parent=23 // pred_check_branch
          %161 = sbr.rel (%p159) target = $region28
        $region27: #{tpu_custom_call.1} parent=23 // pred_region
          %s162 = sand.u32 %s66, 1
          %s163 = scalar_lea.sflag [#allocation5], %s162
          %s164 = sand.u32 %s66, 1
          %s165 = smul.addr %s164, 1024
          %s166 = scalar_lea.vmem [#allocation4], %s165
          %s167 = smul.u32 64, %s23
          %s168 = smul.u32 2, %s24
          %s170 = ssub.s32 16384, 16384
          %171 = vsyncadd %s163, %s170
          %s172 = smul.addr %s167, 2
          %s173 = sadd.s32 %s168, %s172
          %s174 = smul.addr %s173, 128
          %s175 = scalar_lea.hbm %s1, %s174
          %s176 = sshll.u32 %s166, 4
          %s177 = int_to_ptr.vmem [resolvable:$true] %s176
          %182 = dma.hbm_to_vmem [thread:$0]  %s175, 16384, %s177, %s163, 256, 256, 16
        $region28: #{tpu_custom_call.1} parent=23 // pred_fallthru
          _
      $region24: #{tpu_custom_call.1} parent=5 // pred_fallthru
        _
      %p183 = scmp.le.s32.totalorder 1, %s16
      %p184 = scmp.lt.s32.totalorder %s16, 3
      %p185 = pnand %p183, %p184
      %p186 = pneg %p185
      // Predicated region
      $region29: #{tpu_custom_call.1} parent=5 // pred_check
        _
      $region30: #{tpu_custom_call.1} parent=5 // pred_check_branch
        %188 = sbr.rel (%p185) target = $region32
      $region31: #{tpu_custom_call.1} parent=5 // pred_region
        %s189 = ssub.s32 %s16, 1
        %s190 = sand.u32 %s69, 1
        %s191 = scalar_lea.sflag [#allocation5], %s190
        %s192 = sand.u32 %s69, 1
        %s193 = smul.addr %s192, 1024
        %s194 = scalar_lea.vmem [#allocation4], %s193
        // Predicated region
        $region33: #{tpu_custom_call.1} parent=31 // pred_check
          %p195 = pneg %p82
        $region34: #{tpu_custom_call.1} parent=31 // pred_check_branch
          %197 = sbr.rel (%p195) target = $region36
        $region35: #{tpu_custom_call.1} parent=31 // pred_region
          %198 = dma.done %s191, 16384
        $region36: #{tpu_custom_call.1} parent=31 // pred_fallthru
          _
        %s199 = smul.u32 2, %s26
        %p200 = scmp.lt.s32.totalorder %s199, 1
        %s201 = scalar_select %p200, %s199, 1
        %s202 = scalar_lea.vmem %s0, %s201
        %p203 = pneg %p54
        %p204 = pneg %p51
        %s205 = sand.u32 %s69, 1
        %s206 = scalar_lea.sflag [#allocation5], %s205
        %s207 = sand.u32 %s69, 1
        %s208 = smul.addr %s207, 1024
        %s209 = scalar_lea.vmem [#allocation4], %s208
        %p210 = pneg %p82
        %p211 = pneg %p79
        %p212 = pneg %p103
        %p213 = pneg %p100
        %p214 = pneg %p129
        %p215 = pneg %p126
        %s216 = sand.u32 %s116, 1
        %s217 = scalar_lea.sflag [#allocation6], %s216
        %s218 = sand.u32 %s116, 1
        %s219 = smul.addr %s218, 4
        %s220 = scalar_lea.vmem [#allocation7], %s219
        %s221 = smul.u32 2, %s26
        %p222 = scmp.lt.s32.totalorder %s221, 1
        %s223 = scalar_select %p222, %s221, 1
        %s224 = scalar_lea.vmem %s0, %s223
        %s225 = smul.u32 2, %s26
        %s226 = smul.u32 64, %s25
        %s227 = smul.u32 2, %s26
        %s228 = smul.u32 4, %s25
        %p229 = scmp.eq.s32.totalorder %s26, 0
        // Predicated region
        $region37: #{tpu_custom_call.1} parent=31 // pred_check
          %p230 = pneg %p229
        $region38: #{tpu_custom_call.1} parent=31 // pred_check_branch
          %232 = sbr.rel (%p230) target = $region40
        $region39: #{tpu_custom_call.1} parent=31 // pred_region
          %v233 = vlaneseq
          %vm234 = vcmp.ge.s32.totalorder %v233, 0
          %vm235 = vcmp.lt.s32.totalorder %v233, 512
          %vm236 = vmand %vm234, %vm235
          %237 = vst.msk [vmem:[#allocation2] sm:$0xf] %vm236, 0.0
        $region40: #{tpu_custom_call.1} parent=31 // pred_fallthru
          _
        %v238 = vld [vmem:[%s224] sm:$0x3]
        %v239 = vld [vmem:[%s194] sm:$0xff]
        %v240 = vld [vmem:[%s194 + $0x8] sm:$0xff]
        %v241 = vld [vmem:[%s194 + $0x10] sm:$0xff]
        %v242 = vld [vmem:[%s194 + $0x18] sm:$0xff]
        %v243 = vld [vmem:[%s194 + $0x20] sm:$0xff]
        %v244 = vld [vmem:[%s194 + $0x28] sm:$0xff]
        %v245 = vld [vmem:[%s194 + $0x30] sm:$0xff]
        %v246 = vld [vmem:[%s194 + $0x38] sm:$0xff]
        %v247 = vld [vmem:[%s194 + $0x40] sm:$0xff]
        %v248 = vld [vmem:[%s194 + $0x48] sm:$0xff]
        %v249 = vld [vmem:[%s194 + $0x50] sm:$0xff]
        %v250 = vld [vmem:[%s194 + $0x58] sm:$0xff]
        %v251 = vld [vmem:[%s194 + $0x60] sm:$0xff]
        %v252 = vld [vmem:[%s194 + $0x68] sm:$0xff]
        %v253 = vld [vmem:[%s194 + $0x70] sm:$0xff]
        %v254 = vld [vmem:[%s194 + $0x78] sm:$0xff]
        %v255 = vld [vmem:[%s194 + $0x80] sm:$0xff]
        %v256 = vld [vmem:[%s194 + $0x88] sm:$0xff]
        %v257 = vld [vmem:[%s194 + $0x90] sm:$0xff]
        %v258 = vld [vmem:[%s194 + $0x98] sm:$0xff]
        %v259 = vld [vmem:[%s194 + $0xa0] sm:$0xff]
        %v260 = vld [vmem:[%s194 + $0xa8] sm:$0xff]
        %v261 = vld [vmem:[%s194 + $0xb0] sm:$0xff]
        %v262 = vld [vmem:[%s194 + $0xb8] sm:$0xff]
        %v263 = vld [vmem:[%s194 + $0xc0] sm:$0xff]
        %v264 = vld [vmem:[%s194 + $0xc8] sm:$0xff]
        %v265 = vld [vmem:[%s194 + $0xd0] sm:$0xff]
        %v266 = vld [vmem:[%s194 + $0xd8] sm:$0xff]
        %v267 = vld [vmem:[%s194 + $0xe0] sm:$0xff]
        %v268 = vld [vmem:[%s194 + $0xe8] sm:$0xff]
        %v269 = vld [vmem:[%s194 + $0xf0] sm:$0xff]
        %v270 = vld [vmem:[%s194 + $0xf8] sm:$0xff]
        %v271 = vld [vmem:[%s194 + $0x100] sm:$0xff]
        %v272 = vld [vmem:[%s194 + $0x108] sm:$0xff]
        %v273 = vld [vmem:[%s194 + $0x110] sm:$0xff]
        %v274 = vld [vmem:[%s194 + $0x118] sm:$0xff]
        %v275 = vld [vmem:[%s194 + $0x120] sm:$0xff]
        %v276 = vld [vmem:[%s194 + $0x128] sm:$0xff]
        %v277 = vld [vmem:[%s194 + $0x130] sm:$0xff]
        %v278 = vld [vmem:[%s194 + $0x138] sm:$0xff]
        %v279 = vld [vmem:[%s194 + $0x140] sm:$0xff]
        %v280 = vld [vmem:[%s194 + $0x148] sm:$0xff]
        %v281 = vld [vmem:[%s194 + $0x150] sm:$0xff]
        %v282 = vld [vmem:[%s194 + $0x158] sm:$0xff]
        %v283 = vld [vmem:[%s194 + $0x160] sm:$0xff]
        %v284 = vld [vmem:[%s194 + $0x168] sm:$0xff]
        %v285 = vld [vmem:[%s194 + $0x170] sm:$0xff]
        %v286 = vld [vmem:[%s194 + $0x178] sm:$0xff]
        %v287 = vld [vmem:[%s194 + $0x180] sm:$0xff]
        %v288 = vld [vmem:[%s194 + $0x188] sm:$0xff]
        %v289 = vld [vmem:[%s194 + $0x190] sm:$0xff]
        %v290 = vld [vmem:[%s194 + $0x198] sm:$0xff]
        %v291 = vld [vmem:[%s194 + $0x1a0] sm:$0xff]
        %v292 = vld [vmem:[%s194 + $0x1a8] sm:$0xff]
        %v293 = vld [vmem:[%s194 + $0x1b0] sm:$0xff]
        %v294 = vld [vmem:[%s194 + $0x1b8] sm:$0xff]
        %v295 = vld [vmem:[%s194 + $0x1c0] sm:$0xff]
        %v296 = vld [vmem:[%s194 + $0x1c8] sm:$0xff]
        %v297 = vld [vmem:[%s194 + $0x1d0] sm:$0xff]
        %v298 = vld [vmem:[%s194 + $0x1d8] sm:$0xff]
        %v299 = vld [vmem:[%s194 + $0x1e0] sm:$0xff]
        %v300 = vld [vmem:[%s194 + $0x1e8] sm:$0xff]
        %v301 = vld [vmem:[%s194 + $0x1f0] sm:$0xff]
        %v302 = vld [vmem:[%s194 + $0x1f8] sm:$0xff]
        %v303 = vld [vmem:[%s194 + $0x200] sm:$0xff]
        %v304 = vld [vmem:[%s194 + $0x208] sm:$0xff]
        %v305 = vld [vmem:[%s194 + $0x210] sm:$0xff]
        %v306 = vld [vmem:[%s194 + $0x218] sm:$0xff]
        %v307 = vld [vmem:[%s194 + $0x220] sm:$0xff]
        %v308 = vld [vmem:[%s194 + $0x228] sm:$0xff]
        %v309 = vld [vmem:[%s194 + $0x230] sm:$0xff]
        %v310 = vld [vmem:[%s194 + $0x238] sm:$0xff]
        %v311 = vld [vmem:[%s194 + $0x240] sm:$0xff]
        %v312 = vld [vmem:[%s194 + $0x248] sm:$0xff]
        %v313 = vld [vmem:[%s194 + $0x250] sm:$0xff]
        %v314 = vld [vmem:[%s194 + $0x258] sm:$0xff]
        %v315 = vld [vmem:[%s194 + $0x260] sm:$0xff]
        %v316 = vld [vmem:[%s194 + $0x268] sm:$0xff]
        %v317 = vld [vmem:[%s194 + $0x270] sm:$0xff]
        %v318 = vld [vmem:[%s194 + $0x278] sm:$0xff]
        %v319 = vld [vmem:[%s194 + $0x280] sm:$0xff]
        %v320 = vld [vmem:[%s194 + $0x288] sm:$0xff]
        %v321 = vld [vmem:[%s194 + $0x290] sm:$0xff]
        %v322 = vld [vmem:[%s194 + $0x298] sm:$0xff]
        %v323 = vld [vmem:[%s194 + $0x2a0] sm:$0xff]
        %v324 = vld [vmem:[%s194 + $0x2a8] sm:$0xff]
        %v325 = vld [vmem:[%s194 + $0x2b0] sm:$0xff]
        %v326 = vld [vmem:[%s194 + $0x2b8] sm:$0xff]
        %v327 = vld [vmem:[%s194 + $0x2c0] sm:$0xff]
        %v328 = vld [vmem:[%s194 + $0x2c8] sm:$0xff]
        %v329 = vld [vmem:[%s194 + $0x2d0] sm:$0xff]
        %v330 = vld [vmem:[%s194 + $0x2d8] sm:$0xff]
        %v331 = vld [vmem:[%s194 + $0x2e0] sm:$0xff]
        %v332 = vld [vmem:[%s194 + $0x2e8] sm:$0xff]
        %v333 = vld [vmem:[%s194 + $0x2f0] sm:$0xff]
        %v334 = vld [vmem:[%s194 + $0x2f8] sm:$0xff]
        %v335 = vld [vmem:[%s194 + $0x300] sm:$0xff]
        %v336 = vld [vmem:[%s194 + $0x308] sm:$0xff]
        %v337 = vld [vmem:[%s194 + $0x310] sm:$0xff]
        %v338 = vld [vmem:[%s194 + $0x318] sm:$0xff]
        %v339 = vld [vmem:[%s194 + $0x320] sm:$0xff]
        %v340 = vld [vmem:[%s194 + $0x328] sm:$0xff]
        %v341 = vld [vmem:[%s194 + $0x330] sm:$0xff]
        %v342 = vld [vmem:[%s194 + $0x338] sm:$0xff]
        %v343 = vld [vmem:[%s194 + $0x340] sm:$0xff]
        %v344 = vld [vmem:[%s194 + $0x348] sm:$0xff]
        %v345 = vld [vmem:[%s194 + $0x350] sm:$0xff]
        %v346 = vld [vmem:[%s194 + $0x358] sm:$0xff]
        %v347 = vld [vmem:[%s194 + $0x360] sm:$0xff]
        %v348 = vld [vmem:[%s194 + $0x368] sm:$0xff]
        %v349 = vld [vmem:[%s194 + $0x370] sm:$0xff]
        %v350 = vld [vmem:[%s194 + $0x378] sm:$0xff]
        %v351 = vld [vmem:[%s194 + $0x380] sm:$0xff]
        %v352 = vld [vmem:[%s194 + $0x388] sm:$0xff]
        %v353 = vld [vmem:[%s194 + $0x390] sm:$0xff]
        %v354 = vld [vmem:[%s194 + $0x398] sm:$0xff]
        %v355 = vld [vmem:[%s194 + $0x3a0] sm:$0xff]
        %v356 = vld [vmem:[%s194 + $0x3a8] sm:$0xff]
        %v357 = vld [vmem:[%s194 + $0x3b0] sm:$0xff]
        %v358 = vld [vmem:[%s194 + $0x3b8] sm:$0xff]
        %v359 = vld [vmem:[%s194 + $0x3c0] sm:$0xff]
        %v360 = vld [vmem:[%s194 + $0x3c8] sm:$0xff]
        %v361 = vld [vmem:[%s194 + $0x3d0] sm:$0xff]
        %v362 = vld [vmem:[%s194 + $0x3d8] sm:$0xff]
        %v363 = vld [vmem:[%s194 + $0x3e0] sm:$0xff]
        %v364 = vld [vmem:[%s194 + $0x3e8] sm:$0xff]
        %v365 = vld [vmem:[%s194 + $0x3f0] sm:$0xff]
        %v366 = vld [vmem:[%s194 + $0x3f8] sm:$0xff]
        %v367 = vld [vmem:[#allocation2] sm:$0xf]
        %v369 = vlaneseq
        %v370 = vshrl.u32 %v369, 7
        %v371 = vsub.s32 0, %v370
        %v372 = vrot.slane %v238, %v371
        %v373 = vlaneseq
        %v374 = vshrl.u32 %v373, 7
        %v375 = vsub.s32 1, %v374
        %v376 = vrot.slane %v238, %v375
        %379 = vmatprep.subr.mxu0 %v240
        %380 = vmatpush1.xpose.msra.mxu0 %v239
        %381 = vmatprep.subr.mxu0 %v242
        %382 = vmatpush1.xpose.msra.mxu0 %v241
        %383 = vmatprep.subr.mxu0 %v244
        %384 = vmatpush1.xpose.msra.mxu0 %v243
        %385 = vmatprep.subr.mxu0 %v246
        %386 = vmatpush1.xpose.msra.mxu0 %v245
        %387 = vmatprep.subr.mxu0 %v248
        %388 = vmatpush1.xpose.msra.mxu0 %v247
        %389 = vmatprep.subr.mxu0 %v250
        %390 = vmatpush1.xpose.msra.mxu0 %v249
        %391 = vmatprep.subr.mxu0 %v252
        %392 = vmatpush1.xpose.msra.mxu0 %v251
        %393 = vmatprep.subr.mxu0 %v254
        %394 = vmatpush1.xpose.msra.mxu0 %v253
        %395 = vmatprep.subr.mxu0 %v256
        %396 = vmatpush1.xpose.msra.mxu0 %v255
        %397 = vmatprep.subr.mxu0 %v258
        %398 = vmatpush1.xpose.msra.mxu0 %v257
        %399 = vmatprep.subr.mxu0 %v260
        %400 = vmatpush1.xpose.msra.mxu0 %v259
        %401 = vmatprep.subr.mxu0 %v262
        %402 = vmatpush1.xpose.msra.mxu0 %v261
        %403 = vmatprep.subr.mxu0 %v264
        %404 = vmatpush1.xpose.msra.mxu0 %v263
        %405 = vmatprep.subr.mxu0 %v266
        %406 = vmatpush1.xpose.msra.mxu0 %v265
        %407 = vmatprep.subr.mxu0 %v268
        %408 = vmatpush1.xpose.msra.mxu0 %v267
        %409 = vmatprep.subr.mxu0 %v270
        %410 = vmatpush1.xpose.msra.mxu0 %v269
        %411 = vmatprep.subr.mxu0 %v272
        %412 = vmatpush1.xpose.msra.mxu0 %v271
        %413 = vmatprep.subr.mxu0 %v274
        %414 = vmatpush1.xpose.msra.mxu0 %v273
        %415 = vmatprep.subr.mxu0 %v276
        %416 = vmatpush1.xpose.msra.mxu0 %v275
        %417 = vmatprep.subr.mxu0 %v278
        %418 = vmatpush1.xpose.msra.mxu0 %v277
        %419 = vmatprep.subr.mxu0 %v280
        %420 = vmatpush1.xpose.msra.mxu0 %v279
        %421 = vmatprep.subr.mxu0 %v282
        %422 = vmatpush1.xpose.msra.mxu0 %v281
        %423 = vmatprep.subr.mxu0 %v284
        %424 = vmatpush1.xpose.msra.mxu0 %v283
        %425 = vmatprep.subr.mxu0 %v286
        %426 = vmatpush1.xpose.msra.mxu0 %v285
        %427 = vmatprep.subr.mxu0 %v288
        %428 = vmatpush1.xpose.msra.mxu0 %v287
        %429 = vmatprep.subr.mxu0 %v290
        %430 = vmatpush1.xpose.msra.mxu0 %v289
        %431 = vmatprep.subr.mxu0 %v292
        %432 = vmatpush1.xpose.msra.mxu0 %v291
        %433 = vmatprep.subr.mxu0 %v294
        %434 = vmatpush1.xpose.msra.mxu0 %v293
        %435 = vmatprep.subr.mxu0 %v296
        %436 = vmatpush1.xpose.msra.mxu0 %v295
        %437 = vmatprep.subr.mxu0 %v298
        %438 = vmatpush1.xpose.msra.mxu0 %v297
        %439 = vmatprep.subr.mxu0 %v300
        %440 = vmatpush1.xpose.msra.mxu0 %v299
        %441 = vmatprep.subr.mxu0 %v302
        %442 = vmatpush1.xpose.msra.mxu0 %v301
        %443 = vmatprep.mubr.f32.mxu0 %v376
        %444 = vmatmul.mubr.f32.gmra.mrb[0].mxu0 %v372
        %v445 = vpop.f32.mrb[0].mxu0
        %v446 = vadd.f32 0.0, %v445
        %v447 = vpop.f32.mrb[0].mxu0
        %v448 = vadd.f32 0.0, %v447
        %449 = vdwg.mxu0
        %450 = vmatprep.subr.mxu0 %v304
        %451 = vmatpush1.xpose.msra.mxu0 %v303
        %452 = vmatprep.subr.mxu0 %v306
        %453 = vmatpush1.xpose.msra.mxu0 %v305
        %454 = vmatprep.subr.mxu0 %v308
        %455 = vmatpush1.xpose.msra.mxu0 %v307
        %456 = vmatprep.subr.mxu0 %v310
        %457 = vmatpush1.xpose.msra.mxu0 %v309
        %458 = vmatprep.subr.mxu0 %v312
        %459 = vmatpush1.xpose.msra.mxu0 %v311
        %460 = vmatprep.subr.mxu0 %v314
        %461 = vmatpush1.xpose.msra.mxu0 %v313
        %462 = vmatprep.subr.mxu0 %v316
        %463 = vmatpush1.xpose.msra.mxu0 %v315
        %464 = vmatprep.subr.mxu0 %v318
        %465 = vmatpush1.xpose.msra.mxu0 %v317
        %466 = vmatprep.subr.mxu0 %v320
        %467 = vmatpush1.xpose.msra.mxu0 %v319
        %468 = vmatprep.subr.mxu0 %v322
        %469 = vmatpush1.xpose.msra.mxu0 %v321
        %470 = vmatprep.subr.mxu0 %v324
        %471 = vmatpush1.xpose.msra.mxu0 %v323
        %472 = vmatprep.subr.mxu0 %v326
        %473 = vmatpush1.xpose.msra.mxu0 %v325
        %474 = vmatprep.subr.mxu0 %v328
        %475 = vmatpush1.xpose.msra.mxu0 %v327
        %476 = vmatprep.subr.mxu0 %v330
        %477 = vmatpush1.xpose.msra.mxu0 %v329
        %478 = vmatprep.subr.mxu0 %v332
        %479 = vmatpush1.xpose.msra.mxu0 %v331
        %480 = vmatprep.subr.mxu0 %v334
        %481 = vmatpush1.xpose.msra.mxu0 %v333
        %482 = vmatprep.subr.mxu0 %v336
        %483 = vmatpush1.xpose.msra.mxu0 %v335
        %484 = vmatprep.subr.mxu0 %v338
        %485 = vmatpush1.xpose.msra.mxu0 %v337
        %486 = vmatprep.subr.mxu0 %v340
        %487 = vmatpush1.xpose.msra.mxu0 %v339
        %488 = vmatprep.subr.mxu0 %v342
        %489 = vmatpush1.xpose.msra.mxu0 %v341
        %490 = vmatprep.subr.mxu0 %v344
        %491 = vmatpush1.xpose.msra.mxu0 %v343
        %492 = vmatprep.subr.mxu0 %v346
        %493 = vmatpush1.xpose.msra.mxu0 %v345
        %494 = vmatprep.subr.mxu0 %v348
        %495 = vmatpush1.xpose.msra.mxu0 %v347
        %496 = vmatprep.subr.mxu0 %v350
        %497 = vmatpush1.xpose.msra.mxu0 %v349
        %498 = vmatprep.subr.mxu0 %v352
        %499 = vmatpush1.xpose.msra.mxu0 %v351
        %500 = vmatprep.subr.mxu0 %v354
        %501 = vmatpush1.xpose.msra.mxu0 %v353
        %502 = vmatprep.subr.mxu0 %v356
        %503 = vmatpush1.xpose.msra.mxu0 %v355
        %504 = vmatprep.subr.mxu0 %v358
        %505 = vmatpush1.xpose.msra.mxu0 %v357
        %506 = vmatprep.subr.mxu0 %v360
        %507 = vmatpush1.xpose.msra.mxu0 %v359
        %508 = vmatprep.subr.mxu0 %v362
        %509 = vmatpush1.xpose.msra.mxu0 %v361
        %510 = vmatprep.subr.mxu0 %v364
        %511 = vmatpush1.xpose.msra.mxu0 %v363
        %512 = vmatprep.subr.mxu0 %v366
        %513 = vmatpush1.xpose.msra.mxu0 %v365
        %514 = vmatprep.mubr.f32.mxu0 %v376
        %515 = vmatmul.mubr.f32.gmra.mrb[0].mxu0 %v372
        %v516 = vpop.f32.mrb[0].mxu0
        %v517 = vadd.f32 0.0, %v516
        %v518 = vpop.f32.mrb[0].mxu0
        %v519 = vadd.f32 0.0, %v518
        %520 = vdwg.mxu0
        %v525 = vcombine.low %v446, %v448
        %v526 = vcombine.low %v517, %v519
        %v528 = vunpack.c.l.s4 1966171168
        %v529 = vunpack.c.0.s8 %v528
        %v530 = vlaneseq
        %v531 = vshrl.u32 %v530, 7
        %v532 = vsub.s32 %v529, %v531
        %v533 = vrot.slane %v525, %v532
        %v535 = vunpack.c.l.s4 1966171168
        %v536 = vunpack.c.0.s8 %v535
        %v537 = vlaneseq
        %v538 = vshrl.u32 %v537, 7
        %v539 = vsub.s32 %v536, %v538
        %v540 = vrot.slane %v526, %v539
        %v541 = vcombine.low %v533, %v540
        %v543 = vunpack.c.l.s4 1966171168
        %v544 = vunpack.c.0.s8 %v543
        %v545 = vlaneseq
        %v546 = vshrl.u32 %v545, 7
        %v547 = vsub.s32 %v544, %v546
        %v548 = vrot.slane %v541, %v547
        %v550 = vadd.f32 %v367, %v548
        %v551 = vlaneseq
        %vm552 = vcmp.ge.s32.totalorder %v551, 0
        %vm553 = vcmp.lt.s32.totalorder %v551, 512
        %vm554 = vmand %vm552, %vm553
        %555 = vst.msk [vmem:[#allocation2] sm:$0xf] %vm554, %v550
        // Predicated region
        $region41: #{tpu_custom_call.1} parent=31 // pred_check
          %p556 = pneg %p229
        $region42: #{tpu_custom_call.1} parent=31 // pred_check_branch
          %558 = sbr.rel (%p556) target = $region44
        $region43: #{tpu_custom_call.1} parent=31 // pred_region
          %v559 = vld [vmem:[#allocation2] sm:$0xf]
          %s560 = sld [smem:[#allocation3]]
          %v561 = vstv %s560
          %v562 = vadd.f32 %v559, %v561
          %v563 = vsub.f32 0.0, %v562
          %v564 = vmul.f32 %v563, 1.442695
          %v565 = vpow.pop %v564
          %v566 = vadd.f32 %v565, 1.0
          %v567 = vrcp.pop %v566
          %v568 = vmul.f32 1.0, %v567
          %569 = vst.msk [vmem:[%s220] sm:$0xf] %vm554, %v568
        $region44: #{tpu_custom_call.1} parent=31 // pred_fallthru
          _
        %s570 = sand.u32 %s116, 1
        %s571 = scalar_lea.sflag [#allocation6], %s570
        %s572 = sand.u32 %s116, 1
        %s573 = smul.addr %s572, 4
        %s574 = scalar_lea.vmem [#allocation7], %s573
        // Predicated region
        $region45: #{tpu_custom_call.1} parent=31 // pred_check
          %p575 = pneg %p126
        $region46: #{tpu_custom_call.1} parent=31 // pred_check_branch
          %577 = sbr.rel (%p575) target = $region48
        $region47: #{tpu_custom_call.1} parent=31 // pred_region
          %s578 = smul.u32 4, %s25
          %s580 = ssub.s32 64, 64
          %581 = vsyncadd %s571, %s580
          %s582 = smul.addr %s578, 16
          %s583 = scalar_lea.hbm %s3, %s582
          %s585 = sshll.u32 %s574, 4
          %s586 = int_to_ptr.vmem [resolvable:$true] %s585
          %588 = dma.vmem_to_hbm [thread:$0]  %s586, 64, %s583, %s571
        $region48: #{tpu_custom_call.1} parent=31 // pred_fallthru
          _
      $region32: #{tpu_custom_call.1} parent=5 // pred_fallthru
        _
      %p589 = scmp.le.s32.totalorder 2, %s16
      // Predicated region
      $region49: #{tpu_custom_call.1} parent=5 // pred_check
        %p590 = pneg %p589
      $region50: #{tpu_custom_call.1} parent=5 // pred_check_branch
        %592 = sbr.rel (%p590) target = $region52
      $region51: #{tpu_custom_call.1} parent=5 // pred_region
        %s593 = ssub.s32 %s16, 2
        // Predicated region
        $region53: #{tpu_custom_call.1} parent=51 // pred_check
          %p594 = pneg %p132
        $region54: #{tpu_custom_call.1} parent=51 // pred_check_branch
          %596 = sbr.rel (%p594) target = $region56
        $region55: #{tpu_custom_call.1} parent=51 // pred_region
          %s597 = sand.u32 %s117, 1
          %s598 = scalar_lea.sflag [#allocation6], %s597
          %s599 = sand.u32 %s117, 1
          %s600 = smul.addr %s599, 4
          %s601 = scalar_lea.vmem [#allocation7], %s600
          %602 = dma.done %s598, 64
        $region56: #{tpu_custom_call.1} parent=51 // pred_fallthru
          _
      $region52: #{tpu_custom_call.1} parent=5 // pred_fallthru
        _
    $region6: #{tpu_custom_call.1} parent=1 // loop_footer
      %s20 = sadd.s32 1, %s16
    $region7: #{tpu_custom_call.1} parent=1 // loop_footer_branch
      %15 = sbr.rel target = $region3
    $region8: #{tpu_custom_call.1} parent=1 // loop_exit
      _
    %603 = vsyncpa [#allocation5], 1
    %s604 = scalar_lea.sflag [#allocation5], 1
    %605 = vsyncpa %s604, 1
    %606 = vsyncpa [#allocation6], 1
    %s607 = scalar_lea.sflag [#allocation6], 1
    %608 = vsyncpa %s607, 1

</llo_original>
